<compile_context>
chip_gen: v6e
topology: v6e:2x2x1
jax: 0.10.0
libtpu: 0.0.40
codegen_flags: <defaults>
</compile_context>

<pallas_src>
import numpy as np

import jax
import jax.numpy as jnp
from jax import lax
from jax.experimental import pallas as pl
from jax.experimental.pallas import tpu as pltpu


def _round_up(n, m):
    return ((n + m - 1) // m) * m


def _num_tensorcores():
    """Best-effort TensorCores-per-chip.  Returns 1 on any failure, which is
    correct for v5e/v6e and merely conservative (no batch split) on v7x."""
    try:
        info = pltpu.get_tpu_info()
    except Exception:
        return 1
    for name in ("num_cores", "core_count", "tensorcore_count",
                 "num_tensorcores", "cores_per_chip"):
        v = getattr(info, name, None)
        if isinstance(v, int) and v > 0:
            return v
    return 1


# ---------------------------------------------------------------------------
# Kernel factory
# ---------------------------------------------------------------------------
def _make_esn_kernel(*, circulant, beta_plus, beta_minus, tc, bb, feat, res,
                     last_chunk, last_row, unroll):
    """Builds the ESN recurrence kernel.

    Refs (in order):
      x_ref    : (tc, bb, feat)  time-shifted input chunk (xs[g] = x[:, g+1, :])
      w_in_ref : (feat, res)     input_projection.weight.T (res padded to 128x)
      [w_st_ref: (res, res)      state_projection.weight.T -- dense path only]
      out_ref  : (bb, tc, res)   output chunk, BATCH-major (PyTorch layout)
      st_ref   : (tc, bb, res)   time-major scratch: x_proj, then states
      state_ref: (bb, res)       recurrent state, persists across grid steps
    """
    copy_rows = min(tc, 64)   # bounds live-value size of each relayout copy

    def kernel(*refs):
        if circulant:
            x_ref, w_in_ref, out_ref, st_ref, state_ref = refs
            w_st = None
        else:
            x_ref, w_in_ref, w_st_ref, out_ref, st_ref, state_ref = refs
            w_st = w_st_ref[...]                     # hoisted out of the loop

        t_chunk = pl.program_id(1)

        # Start of each sequence (time axis is the inner grid axis, so this is
        # also the start of every new batch block): reset the recurrent state.
        @pl.when(t_chunk == 0)
        def _():
            state_ref[...] = jnp.zeros_like(state_ref)

        # Hoisted input projection: one (tc*bb, feat) @ (feat, res) matmul per
        # chunk, written into the time-major scratch.  The recurrence consumes
        # and overwrites it row-by-row below.
        x2d = x_ref[...].reshape(tc * bb, feat)
        proj = jnp.dot(x2d, w_in_ref[...], preferred_element_type=jnp.float32)
        st_ref[...] = proj.reshape(tc, bb, res)

        def body(k, state):
            if circulant:
                # state @ W_state.T for the 2-band circulant beta matrix:
                #   pre[:, i] = beta_plus  * state[:, (i+1) % R]
                #             + beta_minus * state[:, (i-1) % R]
                # (XLU lane rotations + VPU FMAs; no MXU on the serial chain.)
                pre = (beta_plus * pltpu.roll(state, res - 1, axis=1)
                       + beta_minus * pltpu.roll(state, 1, axis=1))
            else:
                pre = jnp.dot(state.astype(w_st.dtype), w_st,
                              preferred_element_type=jnp.float32)
            new_state = jnp.tanh(pre + st_ref[k])    # st_ref[k] currently = x_proj
            st_ref[k] = new_state
            return new_state

        final_state = lax.fori_loop(0, tc, body, state_ref[...], unroll=unroll)
        state_ref[...] = final_state                 # carry across chunks

        # The reference loop runs t in [1, T); the last output timestep is
        # never written there and must stay exactly zero.
        @pl.when(t_chunk == last_chunk)
        def _():
            st_ref[last_row] = jnp.zeros((bb, res), jnp.float32)

        # Per-chunk time-major -> batch-major relayout (VMEM-only, off the
        # serial chain): the HBM output already has the PyTorch (B, T, R)
        # layout, so no separate XLA transpose pass over the big output.
        for b in range(bb):
            for t0 in range(0, tc, copy_rows):
                t1 = min(t0 + copy_rows, tc)
                out_ref[b, t0:t1, :] = st_ref[t0:t1, b, :]

    return kernel


# ---------------------------------------------------------------------------
# Host-side structure guard for the circulant fast path
# ---------------------------------------------------------------------------
def _analyze_state_matrix(w_state):
    """Is W_state exactly the 2-band circulant produced by create_beta_matrix?"""
    w = np.asarray(jax.device_get(w_state), dtype=np.float32)
    r = w.shape[0]
    if r < 3:
        return False, 0.0, 0.0
    beta_plus = float(w[0, 1])
    beta_minus = float(w[0, r - 1])
    idx = np.arange(r)
    expected = np.zeros((r, r), np.float32)
    expected[idx, (idx + 1) % r] = beta_plus
    expected[idx, (idx - 1) % r] = beta_minus
    return bool(np.allclose(w, expected)), beta_plus, beta_minus


# ---------------------------------------------------------------------------
# Wrapper
# ---------------------------------------------------------------------------
def esn_forward(x, w_in, w_state, *, time_chunk=512, num_cores=None,
                dense_matmul_bf16=True):
    """ESN forward.  x: (B, T, I) f32; w_in: (R, I); w_state: (R, R) -> (B, T, R).

    Note: dispatch between the roll fast path and the dense fallback inspects
    the (frozen) w_state on the host, so call this outside jit.
    """
    batch, seq, feat = x.shape
    res = w_in.shape[0]

    # --- circulant fast-path guard (roll only valid for the exact 2-band
    #     circulant AND a lane-aligned R) -------------------------------------
    is_circ, beta_plus, beta_minus = _analyze_state_matrix(w_state)
    use_roll = is_circ and (res % 128 == 0)
    # Dense fallback: pad R to 128 for a lane-dense MXU N dim / unmasked stores.
    res_p = res if use_roll else _round_up(res, 128)

    # --- batch blocking: split across TensorCores only when it actually helps;
    #     otherwise keep all rows in one block (fills the EUP/XLU pipelines) ---
    cores = num_cores if num_cores is not None else _num_tensorcores()
    cores = max(1, min(int(cores), 4))
    bp0 = _round_up(batch, 8)                      # sublane multiple
    max_bb = 128                                   # caps unrolled copy-out size
    split = cores if (cores > 1 and bp0 >= 8 * cores) else 1
    n_b = max(split, -(-bp0 // max_bb))
    bb = _round_up(-(-bp0 // n_b), 8)
    bp_batch = bb * n_b

    # --- time chunking: balanced chunks (multiple of 8) bound dead-tail work --
    tc_hint = max(8, int(time_chunk))
    n_t0 = max(1, -(-seq // tc_hint))
    tc = _round_up(-(-seq // n_t0), 8)

    # --- VMEM budget (v7x: 64 MiB physical / 32 MiB scoped default) ----------
    def vmem_est(tc_):
        b = 2 * tc_ * bb * feat * 4                 # double-buffered x blocks
        b += 2 * bb * tc_ * res_p * 4               # double-buffered out blocks
        b += 2 * feat * res_p * 4                   # w_in (double-buffered)
        if not use_roll:
            b += 2 * res_p * res_p * (2 if dense_matmul_bf16 else 4)
        b += tc_ * bb * res_p * 4 + bb * res_p * 4  # scratch + state
        return b

    budget = 20 << 20
    while tc > 8 and vmem_est(tc) > budget:
        tc = _round_up(tc // 2, 8)
    n_t = -(-seq // tc)
    seq_pad = n_t * tc

    last_chunk = (seq - 1) // tc
    last_row = (seq - 1) % tc

    # --- operands: xs[g] = x[:, g+1, :] (x_proj[:, 0, :] is never used).  The
    #     +1 shift forces one materializing pass over x anyway, so the (small,
    #     B*T*I) time-major transpose and batch/time zero-padding are fused into
    #     that single XLA copy.  Padded rows stay zero through tanh(0 + 0). ----
    x_t = jnp.transpose(x.astype(jnp.float32), (1, 0, 2))              # (T, B, I)
    xs = jnp.pad(x_t[1:],
                 ((0, seq_pad - (seq - 1)), (0, bp_batch - batch), (0, 0)))
    w_in_t = jnp.pad(jnp.transpose(w_in).astype(jnp.float32),
                     ((0, 0), (0, res_p - res)))                       # (I, Rp)

    kernel = _make_esn_kernel(
        circulant=use_roll, beta_plus=beta_plus, beta_minus=beta_minus,
        tc=tc, bb=bb, feat=feat, res=res_p,
        last_chunk=last_chunk, last_row=last_row,
        unroll=min(tc, 8 if use_roll else 4))

    in_specs = [
        pl.BlockSpec((tc, bb, feat), lambda b, t: (t, b, 0)),
        pl.BlockSpec((feat, res_p), lambda b, t: (0, 0)),
    ]
    operands = [xs, w_in_t]
    if not use_roll:
        w_st = jnp.pad(jnp.transpose(w_state).astype(jnp.float32),
                       ((0, res_p - res), (0, res_p - res)))
        if dense_matmul_bf16:
            w_st = w_st.astype(jnp.bfloat16)        # f32 accumulate in-kernel
        in_specs.append(pl.BlockSpec((res_p, res_p), lambda b, t: (0, 0)))
        operands.append(w_st)

    vmem_limit = max(32 << 20, int(vmem_est(tc) * 1.5) + (4 << 20))

    out = pl.pallas_call(
        kernel,
        out_shape=jax.ShapeDtypeStruct((bp_batch, seq_pad, res_p), jnp.float32),
        grid=(n_b, n_t),
        in_specs=in_specs,
        out_specs=pl.BlockSpec((bb, tc, res_p), lambda b, t: (b, t, 0)),
        scratch_shapes=[pltpu.VMEM((tc, bb, res_p), jnp.float32),
                        pltpu.VMEM((bb, res_p), jnp.float32)],
        compiler_params=pltpu.CompilerParams(
            dimension_semantics=("parallel", "arbitrary"),
            vmem_limit_bytes=vmem_limit,
        ),
    )(*operands)

    # Output is already in the PyTorch (B, T, R) layout; only padding (if any)
    # is trimmed here -- no transpose pass over the output.
    return out[:batch, :seq, :res]


# ---------------------------------------------------------------------------
# Deterministic parameter construction (mirrors ESN.__init__) + reference.
# ---------------------------------------------------------------------------
def make_esn_params(input_size, reservoir_size, alpha=0.7, seed=0):
    key = jax.random.PRNGKey(seed)
    # input_projection.weight ~ U(0, 1), shape (R, I), frozen.
    w_in = jax.random.uniform(key, (reservoir_size, input_size),
                              dtype=jnp.float32, minval=0.0, maxval=1.0)
    # state_projection.weight = create_beta_matrix(R, alpha) (dense equivalent).
    beta_plus = 0.5 * (1.0 - alpha)
    beta_minus = 0.5 * (1.0 + alpha)
    idx = jnp.arange(reservoir_size)
    w_state = jnp.zeros((reservoir_size, reservoir_size), jnp.float32)
    w_state = w_state.at[idx, (idx + 1) % reservoir_size].set(beta_plus)
    w_state = w_state.at[idx, (idx - 1) % reservoir_size].set(beta_minus)
    return w_in, w_state


def esn_reference(x, w_in, w_state):
    B, T, _ = x.shape
    R = w_in.shape[0]
    xp = jnp.einsum("bti,ri->btr", x, w_in)
    states = [jnp.zeros((B, R), jnp.float32)]
    for t in range(1, T):
        states.append(jnp.tanh(states[-1] @ w_state.T + xp[:, t, :]))
    states.append(jnp.zeros((B, R), jnp.float32))      # unwritten last row
    return jnp.stack(states, axis=1)[:, 1:, :]


if __name__ == "__main__":
    key = jax.random.PRNGKey(0)
    k1, k2 = jax.random.split(key)

    # 1) Circulant / roll fast path: lane-dense reservoir, 2 time chunks,
    #    batch padding, cross-chunk state carry, last-timestep zeroing.
    B, T, I, R = 2, 16, 4, 128
    x = jax.random.normal(k1, (B, T, I), dtype=jnp.float32)
    w_in, w_state = make_esn_params(I, R, alpha=0.7, seed=0)
    out = jax.block_until_ready(esn_forward(x, w_in, w_state, time_chunk=8))
    ref = esn_reference(x, w_in, w_state)
    assert out.shape == (B, T, R)
    assert jnp.allclose(out, ref, atol=1e-5, rtol=1e-5), \
        float(jnp.max(jnp.abs(out - ref)))

    # 2) Dense fallback path (R not lane-aligned -> padded to 128) with odd
    #    batch / seq sizes: exercises batch/time padding, R padding and the
    #    cross-chunk state carry.  First exact f32, then the default bf16 MXU.
    B2, T2, I2, R2 = 3, 11, 5, 32
    x2 = jax.random.normal(k2, (B2, T2, I2), dtype=jnp.float32)
    w_in2, w_state2 = make_esn_params(I2, R2, alpha=0.7, seed=1)
    ref2 = esn_reference(x2, w_in2, w_state2)

    out2 = jax.block_until_ready(
        esn_forward(x2, w_in2, w_state2, time_chunk=8, dense_matmul_bf16=False))
    assert out2.shape == (B2, T2, R2)
    assert jnp.allclose(out2, ref2, atol=1e-5, rtol=1e-5), \
        float(jnp.max(jnp.abs(out2 - ref2)))

    out3 = jax.block_until_ready(
        esn_forward(x2, w_in2, w_state2, time_chunk=8))   # bf16 MXU default
    assert jnp.allclose(out3, ref2, atol=5e-2, rtol=5e-2), \
        float(jnp.max(jnp.abs(out3 - ref2)))

    print("KERNEL_OK")
</pallas_src>

<mosaic_0001>
module attributes {stable_mosaic.version = 11 : i64} {
  func.func @kernel(%arg0: i32, %arg1: i32, %arg2: memref<8x8x4xf32, #tpu.memory_space<vmem>>, %arg3: memref<4x128xf32, #tpu.memory_space<vmem>>, %arg4: memref<8x8x128xf32, #tpu.memory_space<vmem>>, %arg5: memref<8x8x128xf32, #tpu.memory_space<vmem>>, %arg6: memref<8x128xf32, #tpu.memory_space<vmem>>) attributes {dimension_semantics = [#tpu.dimension_semantics<parallel>, #tpu.dimension_semantics<arbitrary>], iteration_bounds = array<i64: 1, 2>, scalar_prefetch = 0 : i64, scratch_operands = 2 : i64, tpu.core_type = #tpu.core_type<tc>, window_params = [{transform_indices = @transform_0, window_bounds = array<i64: 8, 8, 4>}, {pipeline_mode = #tpu.pipeline_mode<synchronous>, transform_indices = @transform_1, window_bounds = array<i64: 4, 128>}, {transform_indices = @transform_2, window_bounds = array<i64: 8, 8, 128>}]} {
    %c0_i32 = arith.constant 0 : i32
    %0 = arith.cmpi eq, %arg1, %c0_i32 : i32
    %1 = arith.extui %0 : i1 to i32
    %c0_i32_0 = arith.constant 0 : i32
    %2 = arith.cmpi ne, %1, %c0_i32_0 : i32
    scf.if %2 {
      %cst_119 = arith.constant 0.000000e+00 : f32
      %182 = vector.broadcast %cst_119 : f32 to vector<8x128xf32>
      %c0_120 = arith.constant 0 : index
      %c0_121 = arith.constant 0 : index
      %183 = vector.load %arg6[%c0_120, %c0_121] : memref<8x128xf32, #tpu.memory_space<vmem>>, vector<8x128xf32>
      tpu.vector_store %arg6[%c0_120, %c0_121], %182 {strides = array<i32>} : memref<8x128xf32, #tpu.memory_space<vmem>>, vector<8x128xf32>,
    } else {
    }
    %c0 = arith.constant 0 : index
    %c0_1 = arith.constant 0 : index
    %c0_2 = arith.constant 0 : index
    %3 = vector.load %arg2[%c0, %c0_1, %c0_2] : memref<8x8x4xf32, #tpu.memory_space<vmem>>, vector<8x8x4xf32>
    %4 = vector.shape_cast %3 : vector<8x8x4xf32> to vector<64x4xf32>
    %c0_3 = arith.constant 0 : index
    %c0_4 = arith.constant 0 : index
    %5 = vector.load %arg3[%c0_3, %c0_4] : memref<4x128xf32, #tpu.memory_space<vmem>>, vector<4x128xf32>
    %cst = arith.constant dense<0.000000e+00> : vector<64x128xf32>
    %6 = tpu.matmul %4, %5, %cst {dimension_numbers = #tpu.dot_dimension_numbers<[1], [0], [0], [1], [0, 0, 1, 1], [], []>} : vector<64x4xf32>, vector<4x128xf32>, vector<64x128xf32> -> vector<64x128xf32>
    %7 = vector.shape_cast %6 : vector<64x128xf32> to vector<8x8x128xf32>
    %c0_5 = arith.constant 0 : index
    %c0_6 = arith.constant 0 : index
    %c0_7 = arith.constant 0 : index
    %8 = vector.load %arg5[%c0_5, %c0_6, %c0_7] : memref<8x8x128xf32, #tpu.memory_space<vmem>>, vector<8x8x128xf32>
    tpu.vector_store %arg5[%c0_5, %c0_6, %c0_7], %7 {strides = array<i32>} : memref<8x8x128xf32, #tpu.memory_space<vmem>>, vector<8x8x128xf32>,
    %c0_8 = arith.constant 0 : index
    %c0_9 = arith.constant 0 : index
    %9 = vector.load %arg6[%c0_8, %c0_9] : memref<8x128xf32, #tpu.memory_space<vmem>>, vector<8x128xf32>
    %c0_i32_10 = arith.constant 0 : i32
    %c127_i32 = arith.constant 127 : i32
    %10 = tpu.dynamic_rotate %9 by %c127_i32 dim 1 : vector<8x128xf32>, i32 -> vector<8x128xf32>
    %cst_11 = arith.constant 1.500000e-01 : f32
    %11 = vector.broadcast %cst_11 : f32 to vector<8x128xf32>
    %12 = arith.mulf %11, %10 : vector<8x128xf32>
    %c1_i32 = arith.constant 1 : i32
    %13 = tpu.dynamic_rotate %9 by %c1_i32 dim 1 : vector<8x128xf32>, i32 -> vector<8x128xf32>
    %cst_12 = arith.constant 8.500000e-01 : f32
    %14 = vector.broadcast %cst_12 : f32 to vector<8x128xf32>
    %15 = arith.mulf %14, %13 : vector<8x128xf32>
    %16 = arith.addf %12, %15 : vector<8x128xf32>
    %17 = arith.index_cast %c0_i32_10 : i32 to index
    %c0_13 = arith.constant 0 : index
    %c0_14 = arith.constant 0 : index
    %18 = vector.load %arg5[%17, %c0_13, %c0_14] : memref<8x8x128xf32, #tpu.memory_space<vmem>>, vector<1x8x128xf32>
    %19 = vector.shape_cast %18 : vector<1x8x128xf32> to vector<8x128xf32>
    %20 = arith.addf %16, %19 : vector<8x128xf32>
    %21 = math.tanh %20 : vector<8x128xf32>
    %22 = arith.index_cast %c0_i32_10 : i32 to index
    %c0_15 = arith.constant 0 : index
    %c0_16 = arith.constant 0 : index
    %23 = vector.load %arg5[%22, %c0_15, %c0_16] : memref<8x8x128xf32, #tpu.memory_space<vmem>>, vector<1x8x128xf32>
    %24 = vector.shape_cast %23 : vector<1x8x128xf32> to vector<8x128xf32>
    %25 = vector.shape_cast %21 : vector<8x128xf32> to vector<1x8x128xf32>
    tpu.vector_store %arg5[%22, %c0_15, %c0_16], %25 {strides = array<i32>} : memref<8x8x128xf32, #tpu.memory_space<vmem>>, vector<1x8x128xf32>,
    %c1_i32_17 = arith.constant 1 : i32
    %c127_i32_18 = arith.constant 127 : i32
    %26 = tpu.dynamic_rotate %21 by %c127_i32_18 dim 1 : vector<8x128xf32>, i32 -> vector<8x128xf32>
    %cst_19 = arith.constant 1.500000e-01 : f32
    %27 = vector.broadcast %cst_19 : f32 to vector<8x128xf32>
    %28 = arith.mulf %27, %26 : vector<8x128xf32>
    %c1_i32_20 = arith.constant 1 : i32
    %29 = tpu.dynamic_rotate %21 by %c1_i32_20 dim 1 : vector<8x128xf32>, i32 -> vector<8x128xf32>
    %cst_21 = arith.constant 8.500000e-01 : f32
    %30 = vector.broadcast %cst_21 : f32 to vector<8x128xf32>
    %31 = arith.mulf %30, %29 : vector<8x128xf32>
    %32 = arith.addf %28, %31 : vector<8x128xf32>
    %33 = arith.index_cast %c1_i32_17 : i32 to index
    %c0_22 = arith.constant 0 : index
    %c0_23 = arith.constant 0 : index
    %34 = vector.load %arg5[%33, %c0_22, %c0_23] : memref<8x8x128xf32, #tpu.memory_space<vmem>>, vector<1x8x128xf32>
    %35 = vector.shape_cast %34 : vector<1x8x128xf32> to vector<8x128xf32>
    %36 = arith.addf %32, %35 : vector<8x128xf32>
    %37 = math.tanh %36 : vector<8x128xf32>
    %38 = arith.index_cast %c1_i32_17 : i32 to index
    %c0_24 = arith.constant 0 : index
    %c0_25 = arith.constant 0 : index
    %39 = vector.load %arg5[%38, %c0_24, %c0_25] : memref<8x8x128xf32, #tpu.memory_space<vmem>>, vector<1x8x128xf32>
    %40 = vector.shape_cast %39 : vector<1x8x128xf32> to vector<8x128xf32>
    %41 = vector.shape_cast %37 : vector<8x128xf32> to vector<1x8x128xf32>
    tpu.vector_store %arg5[%38, %c0_24, %c0_25], %41 {strides = array<i32>} : memref<8x8x128xf32, #tpu.memory_space<vmem>>, vector<1x8x128xf32>,
    %c2_i32 = arith.constant 2 : i32
    %c127_i32_26 = arith.constant 127 : i32
    %42 = tpu.dynamic_rotate %37 by %c127_i32_26 dim 1 : vector<8x128xf32>, i32 -> vector<8x128xf32>
    %cst_27 = arith.constant 1.500000e-01 : f32
    %43 = vector.broadcast %cst_27 : f32 to vector<8x128xf32>
    %44 = arith.mulf %43, %42 : vector<8x128xf32>
    %c1_i32_28 = arith.constant 1 : i32
    %45 = tpu.dynamic_rotate %37 by %c1_i32_28 dim 1 : vector<8x128xf32>, i32 -> vector<8x128xf32>
    %cst_29 = arith.constant 8.500000e-01 : f32
    %46 = vector.broadcast %cst_29 : f32 to vector<8x128xf32>
    %47 = arith.mulf %46, %45 : vector<8x128xf32>
    %48 = arith.addf %44, %47 : vector<8x128xf32>
    %49 = arith.index_cast %c2_i32 : i32 to index
    %c0_30 = arith.constant 0 : index
    %c0_31 = arith.constant 0 : index
    %50 = vector.load %arg5[%49, %c0_30, %c0_31] : memref<8x8x128xf32, #tpu.memory_space<vmem>>, vector<1x8x128xf32>
    %51 = vector.shape_cast %50 : vector<1x8x128xf32> to vector<8x128xf32>
    %52 = arith.addf %48, %51 : vector<8x128xf32>
    %53 = math.tanh %52 : vector<8x128xf32>
    %54 = arith.index_cast %c2_i32 : i32 to index
    %c0_32 = arith.constant 0 : index
    %c0_33 = arith.constant 0 : index
    %55 = vector.load %arg5[%54, %c0_32, %c0_33] : memref<8x8x128xf32, #tpu.memory_space<vmem>>, vector<1x8x128xf32>
    %56 = vector.shape_cast %55 : vector<1x8x128xf32> to vector<8x128xf32>
    %57 = vector.shape_cast %53 : vector<8x128xf32> to vector<1x8x128xf32>
    tpu.vector_store %arg5[%54, %c0_32, %c0_33], %57 {strides = array<i32>} : memref<8x8x128xf32, #tpu.memory_space<vmem>>, vector<1x8x128xf32>,
    %c3_i32 = arith.constant 3 : i32
    %c127_i32_34 = arith.constant 127 : i32
    %58 = tpu.dynamic_rotate %53 by %c127_i32_34 dim 1 : vector<8x128xf32>, i32 -> vector<8x128xf32>
    %cst_35 = arith.constant 1.500000e-01 : f32
    %59 = vector.broadcast %cst_35 : f32 to vector<8x128xf32>
    %60 = arith.mulf %59, %58 : vector<8x128xf32>
    %c1_i32_36 = arith.constant 1 : i32
    %61 = tpu.dynamic_rotate %53 by %c1_i32_36 dim 1 : vector<8x128xf32>, i32 -> vector<8x128xf32>
    %cst_37 = arith.constant 8.500000e-01 : f32
    %62 = vector.broadcast %cst_37 : f32 to vector<8x128xf32>
    %63 = arith.mulf %62, %61 : vector<8x128xf32>
    %64 = arith.addf %60, %63 : vector<8x128xf32>
    %65 = arith.index_cast %c3_i32 : i32 to index
    %c0_38 = arith.constant 0 : index
    %c0_39 = arith.constant 0 : index
    %66 = vector.load %arg5[%65, %c0_38, %c0_39] : memref<8x8x128xf32, #tpu.memory_space<vmem>>, vector<1x8x128xf32>
    %67 = vector.shape_cast %66 : vector<1x8x128xf32> to vector<8x128xf32>
    %68 = arith.addf %64, %67 : vector<8x128xf32>
    %69 = math.tanh %68 : vector<8x128xf32>
    %70 = arith.index_cast %c3_i32 : i32 to index
    %c0_40 = arith.constant 0 : index
    %c0_41 = arith.constant 0 : index
    %71 = vector.load %arg5[%70, %c0_40, %c0_41] : memref<8x8x128xf32, #tpu.memory_space<vmem>>, vector<1x8x128xf32>
    %72 = vector.shape_cast %71 : vector<1x8x128xf32> to vector<8x128xf32>
    %73 = vector.shape_cast %69 : vector<8x128xf32> to vector<1x8x128xf32>
    tpu.vector_store %arg5[%70, %c0_40, %c0_41], %73 {strides = array<i32>} : memref<8x8x128xf32, #tpu.memory_space<vmem>>, vector<1x8x128xf32>,
    %c4_i32 = arith.constant 4 : i32
    %c127_i32_42 = arith.constant 127 : i32
    %74 = tpu.dynamic_rotate %69 by %c127_i32_42 dim 1 : vector<8x128xf32>, i32 -> vector<8x128xf32>
    %cst_43 = arith.constant 1.500000e-01 : f32
    %75 = vector.broadcast %cst_43 : f32 to vector<8x128xf32>
    %76 = arith.mulf %75, %74 : vector<8x128xf32>
    %c1_i32_44 = arith.constant 1 : i32
    %77 = tpu.dynamic_rotate %69 by %c1_i32_44 dim 1 : vector<8x128xf32>, i32 -> vector<8x128xf32>
    %cst_45 = arith.constant 8.500000e-01 : f32
    %78 = vector.broadcast %cst_45 : f32 to vector<8x128xf32>
    %79 = arith.mulf %78, %77 : vector<8x128xf32>
    %80 = arith.addf %76, %79 : vector<8x128xf32>
    %81 = arith.index_cast %c4_i32 : i32 to index
    %c0_46 = arith.constant 0 : index
    %c0_47 = arith.constant 0 : index
    %82 = vector.load %arg5[%81, %c0_46, %c0_47] : memref<8x8x128xf32, #tpu.memory_space<vmem>>, vector<1x8x128xf32>
    %83 = vector.shape_cast %82 : vector<1x8x128xf32> to vector<8x128xf32>
    %84 = arith.addf %80, %83 : vector<8x128xf32>
    %85 = math.tanh %84 : vector<8x128xf32>
    %86 = arith.index_cast %c4_i32 : i32 to index
    %c0_48 = arith.constant 0 : index
    %c0_49 = arith.constant 0 : index
    %87 = vector.load %arg5[%86, %c0_48, %c0_49] : memref<8x8x128xf32, #tpu.memory_space<vmem>>, vector<1x8x128xf32>
    %88 = vector.shape_cast %87 : vector<1x8x128xf32> to vector<8x128xf32>
    %89 = vector.shape_cast %85 : vector<8x128xf32> to vector<1x8x128xf32>
    tpu.vector_store %arg5[%86, %c0_48, %c0_49], %89 {strides = array<i32>} : memref<8x8x128xf32, #tpu.memory_space<vmem>>, vector<1x8x128xf32>,
    %c5_i32 = arith.constant 5 : i32
    %c127_i32_50 = arith.constant 127 : i32
    %90 = tpu.dynamic_rotate %85 by %c127_i32_50 dim 1 : vector<8x128xf32>, i32 -> vector<8x128xf32>
    %cst_51 = arith.constant 1.500000e-01 : f32
    %91 = vector.broadcast %cst_51 : f32 to vector<8x128xf32>
    %92 = arith.mulf %91, %90 : vector<8x128xf32>
    %c1_i32_52 = arith.constant 1 : i32
    %93 = tpu.dynamic_rotate %85 by %c1_i32_52 dim 1 : vector<8x128xf32>, i32 -> vector<8x128xf32>
    %cst_53 = arith.constant 8.500000e-01 : f32
    %94 = vector.broadcast %cst_53 : f32 to vector<8x128xf32>
    %95 = arith.mulf %94, %93 : vector<8x128xf32>
    %96 = arith.addf %92, %95 : vector<8x128xf32>
    %97 = arith.index_cast %c5_i32 : i32 to index
    %c0_54 = arith.constant 0 : index
    %c0_55 = arith.constant 0 : index
    %98 = vector.load %arg5[%97, %c0_54, %c0_55] : memref<8x8x128xf32, #tpu.memory_space<vmem>>, vector<1x8x128xf32>
    %99 = vector.shape_cast %98 : vector<1x8x128xf32> to vector<8x128xf32>
    %100 = arith.addf %96, %99 : vector<8x128xf32>
    %101 = math.tanh %100 : vector<8x128xf32>
    %102 = arith.index_cast %c5_i32 : i32 to index
    %c0_56 = arith.constant 0 : index
    %c0_57 = arith.constant 0 : index
    %103 = vector.load %arg5[%102, %c0_56, %c0_57] : memref<8x8x128xf32, #tpu.memory_space<vmem>>, vector<1x8x128xf32>
    %104 = vector.shape_cast %103 : vector<1x8x128xf32> to vector<8x128xf32>
    %105 = vector.shape_cast %101 : vector<8x128xf32> to vector<1x8x128xf32>
    tpu.vector_store %arg5[%102, %c0_56, %c0_57], %105 {strides = array<i32>} : memref<8x8x128xf32, #tpu.memory_space<vmem>>, vector<1x8x128xf32>,
    %c6_i32 = arith.constant 6 : i32
    %c127_i32_58 = arith.constant 127 : i32
    %106 = tpu.dynamic_rotate %101 by %c127_i32_58 dim 1 : vector<8x128xf32>, i32 -> vector<8x128xf32>
    %cst_59 = arith.constant 1.500000e-01 : f32
    %107 = vector.broadcast %cst_59 : f32 to vector<8x128xf32>
    %108 = arith.mulf %107, %106 : vector<8x128xf32>
    %c1_i32_60 = arith.constant 1 : i32
    %109 = tpu.dynamic_rotate %101 by %c1_i32_60 dim 1 : vector<8x128xf32>, i32 -> vector<8x128xf32>
    %cst_61 = arith.constant 8.500000e-01 : f32
    %110 = vector.broadcast %cst_61 : f32 to vector<8x128xf32>
    %111 = arith.mulf %110, %109 : vector<8x128xf32>
    %112 = arith.addf %108, %111 : vector<8x128xf32>
    %113 = arith.index_cast %c6_i32 : i32 to index
    %c0_62 = arith.constant 0 : index
    %c0_63 = arith.constant 0 : index
    %114 = vector.load %arg5[%113, %c0_62, %c0_63] : memref<8x8x128xf32, #tpu.memory_space<vmem>>, vector<1x8x128xf32>
    %115 = vector.shape_cast %114 : vector<1x8x128xf32> to vector<8x128xf32>
    %116 = arith.addf %112, %115 : vector<8x128xf32>
    %117 = math.tanh %116 : vector<8x128xf32>
    %118 = arith.index_cast %c6_i32 : i32 to index
    %c0_64 = arith.constant 0 : index
    %c0_65 = arith.constant 0 : index
    %119 = vector.load %arg5[%118, %c0_64, %c0_65] : memref<8x8x128xf32, #tpu.memory_space<vmem>>, vector<1x8x128xf32>
    %120 = vector.shape_cast %119 : vector<1x8x128xf32> to vector<8x128xf32>
    %121 = vector.shape_cast %117 : vector<8x128xf32> to vector<1x8x128xf32>
    tpu.vector_store %arg5[%118, %c0_64, %c0_65], %121 {strides = array<i32>} : memref<8x8x128xf32, #tpu.memory_space<vmem>>, vector<1x8x128xf32>,
    %c7_i32 = arith.constant 7 : i32
    %c127_i32_66 = arith.constant 127 : i32
    %122 = tpu.dynamic_rotate %117 by %c127_i32_66 dim 1 : vector<8x128xf32>, i32 -> vector<8x128xf32>
    %cst_67 = arith.constant 1.500000e-01 : f32
    %123 = vector.broadcast %cst_67 : f32 to vector<8x128xf32>
    %124 = arith.mulf %123, %122 : vector<8x128xf32>
    %c1_i32_68 = arith.constant 1 : i32
    %125 = tpu.dynamic_rotate %117 by %c1_i32_68 dim 1 : vector<8x128xf32>, i32 -> vector<8x128xf32>
    %cst_69 = arith.constant 8.500000e-01 : f32
    %126 = vector.broadcast %cst_69 : f32 to vector<8x128xf32>
    %127 = arith.mulf %126, %125 : vector<8x128xf32>
    %128 = arith.addf %124, %127 : vector<8x128xf32>
    %129 = arith.index_cast %c7_i32 : i32 to index
    %c0_70 = arith.constant 0 : index
    %c0_71 = arith.constant 0 : index
    %130 = vector.load %arg5[%129, %c0_70, %c0_71] : memref<8x8x128xf32, #tpu.memory_space<vmem>>, vector<1x8x128xf32>
    %131 = vector.shape_cast %130 : vector<1x8x128xf32> to vector<8x128xf32>
    %132 = arith.addf %128, %131 : vector<8x128xf32>
    %133 = math.tanh %132 : vector<8x128xf32>
    %134 = arith.index_cast %c7_i32 : i32 to index
    %c0_72 = arith.constant 0 : index
    %c0_73 = arith.constant 0 : index
    %135 = vector.load %arg5[%134, %c0_72, %c0_73] : memref<8x8x128xf32, #tpu.memory_space<vmem>>, vector<1x8x128xf32>
    %136 = vector.shape_cast %135 : vector<1x8x128xf32> to vector<8x128xf32>
    %137 = vector.shape_cast %133 : vector<8x128xf32> to vector<1x8x128xf32>
    tpu.vector_store %arg5[%134, %c0_72, %c0_73], %137 {strides = array<i32>} : memref<8x8x128xf32, #tpu.memory_space<vmem>>, vector<1x8x128xf32>,
    %c8_i32 = arith.constant 8 : i32
    %c0_74 = arith.constant 0 : index
    %c0_75 = arith.constant 0 : index
    %138 = vector.load %arg6[%c0_74, %c0_75] : memref<8x128xf32, #tpu.memory_space<vmem>>, vector<8x128xf32>
    tpu.vector_store %arg6[%c0_74, %c0_75], %133 {strides = array<i32>} : memref<8x128xf32, #tpu.memory_space<vmem>>, vector<8x128xf32>,
    %c1_i32_76 = arith.constant 1 : i32
    %139 = arith.cmpi eq, %arg1, %c1_i32_76 : i32
    %140 = arith.extui %139 : i1 to i32
    %c0_i32_77 = arith.constant 0 : i32
    %141 = arith.cmpi ne, %140, %c0_i32_77 : i32
    scf.if %141 {
      %cst_119 = arith.constant 0.000000e+00 : f32
      %182 = vector.broadcast %cst_119 : f32 to vector<8x128xf32>
      %c7_120 = arith.constant 7 : index
      %c0_121 = arith.constant 0 : index
      %c0_122 = arith.constant 0 : index
      %183 = vector.load %arg5[%c7_120, %c0_121, %c0_122] : memref<8x8x128xf32, #tpu.memory_space<vmem>>, vector<1x8x128xf32>
      %184 = vector.shape_cast %183 : vector<1x8x128xf32> to vector<8x128xf32>
      %185 = vector.shape_cast %182 : vector<8x128xf32> to vector<1x8x128xf32>
      tpu.vector_store %arg5[%c7_120, %c0_121, %c0_122], %185 {strides = array<i32>} : memref<8x8x128xf32, #tpu.memory_space<vmem>>, vector<1x8x128xf32>,
    } else {
    }
    %c0_78 = arith.constant 0 : index
    %c0_79 = arith.constant 0 : index
    %c0_80 = arith.constant 0 : index
    %142 = vector.load %arg5[%c0_78, %c0_79, %c0_80] : memref<8x8x128xf32, #tpu.memory_space<vmem>>, vector<8x1x128xf32>
    %143 = vector.shape_cast %142 : vector<8x1x128xf32> to vector<8x128xf32>
    %c0_81 = arith.constant 0 : index
    %c0_82 = arith.constant 0 : index
    %c0_83 = arith.constant 0 : index
    %144 = vector.load %arg4[%c0_81, %c0_82, %c0_83] : memref<8x8x128xf32, #tpu.memory_space<vmem>>, vector<1x8x128xf32>
    %145 = vector.shape_cast %144 : vector<1x8x128xf32> to vector<8x128xf32>
    %146 = vector.shape_cast %143 : vector<8x128xf32> to vector<1x8x128xf32>
    tpu.vector_store %arg4[%c0_81, %c0_82, %c0_83], %146 {strides = array<i32>} : memref<8x8x128xf32, #tpu.memory_space<vmem>>, vector<1x8x128xf32>,
    %c0_84 = arith.constant 0 : index
    %c1 = arith.constant 1 : index
    %c0_85 = arith.constant 0 : index
    %147 = vector.load %arg5[%c0_84, %c1, %c0_85] : memref<8x8x128xf32, #tpu.memory_space<vmem>>, vector<8x1x128xf32>
    %148 = vector.shape_cast %147 : vector<8x1x128xf32> to vector<8x128xf32>
    %c1_86 = arith.constant 1 : index
    %c0_87 = arith.constant 0 : index
    %c0_88 = arith.constant 0 : index
    %149 = vector.load %arg4[%c1_86, %c0_87, %c0_88] : memref<8x8x128xf32, #tpu.memory_space<vmem>>, vector<1x8x128xf32>
    %150 = vector.shape_cast %149 : vector<1x8x128xf32> to vector<8x128xf32>
    %151 = vector.shape_cast %148 : vector<8x128xf32> to vector<1x8x128xf32>
    tpu.vector_store %arg4[%c1_86, %c0_87, %c0_88], %151 {strides = array<i32>} : memref<8x8x128xf32, #tpu.memory_space<vmem>>, vector<1x8x128xf32>,
    %c0_89 = arith.constant 0 : index
    %c2 = arith.constant 2 : index
    %c0_90 = arith.constant 0 : index
    %152 = vector.load %arg5[%c0_89, %c2, %c0_90] : memref<8x8x128xf32, #tpu.memory_space<vmem>>, vector<8x1x128xf32>
    %153 = vector.shape_cast %152 : vector<8x1x128xf32> to vector<8x128xf32>
    %c2_91 = arith.constant 2 : index
    %c0_92 = arith.constant 0 : index
    %c0_93 = arith.constant 0 : index
    %154 = vector.load %arg4[%c2_91, %c0_92, %c0_93] : memref<8x8x128xf32, #tpu.memory_space<vmem>>, vector<1x8x128xf32>
    %155 = vector.shape_cast %154 : vector<1x8x128xf32> to vector<8x128xf32>
    %156 = vector.shape_cast %153 : vector<8x128xf32> to vector<1x8x128xf32>
    tpu.vector_store %arg4[%c2_91, %c0_92, %c0_93], %156 {strides = array<i32>} : memref<8x8x128xf32, #tpu.memory_space<vmem>>, vector<1x8x128xf32>,
    %c0_94 = arith.constant 0 : index
    %c3 = arith.constant 3 : index
    %c0_95 = arith.constant 0 : index
    %157 = vector.load %arg5[%c0_94, %c3, %c0_95] : memref<8x8x128xf32, #tpu.memory_space<vmem>>, vector<8x1x128xf32>
    %158 = vector.shape_cast %157 : vector<8x1x128xf32> to vector<8x128xf32>
    %c3_96 = arith.constant 3 : index
    %c0_97 = arith.constant 0 : index
    %c0_98 = arith.constant 0 : index
    %159 = vector.load %arg4[%c3_96, %c0_97, %c0_98] : memref<8x8x128xf32, #tpu.memory_space<vmem>>, vector<1x8x128xf32>
    %160 = vector.shape_cast %159 : vector<1x8x128xf32> to vector<8x128xf32>
    %161 = vector.shape_cast %158 : vector<8x128xf32> to vector<1x8x128xf32>
    tpu.vector_store %arg4[%c3_96, %c0_97, %c0_98], %161 {strides = array<i32>} : memref<8x8x128xf32, #tpu.memory_space<vmem>>, vector<1x8x128xf32>,
    %c0_99 = arith.constant 0 : index
    %c4 = arith.constant 4 : index
    %c0_100 = arith.constant 0 : index
    %162 = vector.load %arg5[%c0_99, %c4, %c0_100] : memref<8x8x128xf32, #tpu.memory_space<vmem>>, vector<8x1x128xf32>
    %163 = vector.shape_cast %162 : vector<8x1x128xf32> to vector<8x128xf32>
    %c4_101 = arith.constant 4 : index
    %c0_102 = arith.constant 0 : index
    %c0_103 = arith.constant 0 : index
    %164 = vector.load %arg4[%c4_101, %c0_102, %c0_103] : memref<8x8x128xf32, #tpu.memory_space<vmem>>, vector<1x8x128xf32>
    %165 = vector.shape_cast %164 : vector<1x8x128xf32> to vector<8x128xf32>
    %166 = vector.shape_cast %163 : vector<8x128xf32> to vector<1x8x128xf32>
    tpu.vector_store %arg4[%c4_101, %c0_102, %c0_103], %166 {strides = array<i32>} : memref<8x8x128xf32, #tpu.memory_space<vmem>>, vector<1x8x128xf32>,
    %c0_104 = arith.constant 0 : index
    %c5 = arith.constant 5 : index
    %c0_105 = arith.constant 0 : index
    %167 = vector.load %arg5[%c0_104, %c5, %c0_105] : memref<8x8x128xf32, #tpu.memory_space<vmem>>, vector<8x1x128xf32>
    %168 = vector.shape_cast %167 : vector<8x1x128xf32> to vector<8x128xf32>
    %c5_106 = arith.constant 5 : index
    %c0_107 = arith.constant 0 : index
    %c0_108 = arith.constant 0 : index
    %169 = vector.load %arg4[%c5_106, %c0_107, %c0_108] : memref<8x8x128xf32, #tpu.memory_space<vmem>>, vector<1x8x128xf32>
    %170 = vector.shape_cast %169 : vector<1x8x128xf32> to vector<8x128xf32>
    %171 = vector.shape_cast %168 : vector<8x128xf32> to vector<1x8x128xf32>
    tpu.vector_store %arg4[%c5_106, %c0_107, %c0_108], %171 {strides = array<i32>} : memref<8x8x128xf32, #tpu.memory_space<vmem>>, vector<1x8x128xf32>,
    %c0_109 = arith.constant 0 : index
    %c6 = arith.constant 6 : index
    %c0_110 = arith.constant 0 : index
    %172 = vector.load %arg5[%c0_109, %c6, %c0_110] : memref<8x8x128xf32, #tpu.memory_space<vmem>>, vector<8x1x128xf32>
    %173 = vector.shape_cast %172 : vector<8x1x128xf32> to vector<8x128xf32>
    %c6_111 = arith.constant 6 : index
    %c0_112 = arith.constant 0 : index
    %c0_113 = arith.constant 0 : index
    %174 = vector.load %arg4[%c6_111, %c0_112, %c0_113] : memref<8x8x128xf32, #tpu.memory_space<vmem>>, vector<1x8x128xf32>
    %175 = vector.shape_cast %174 : vector<1x8x128xf32> to vector<8x128xf32>
    %176 = vector.shape_cast %173 : vector<8x128xf32> to vector<1x8x128xf32>
    tpu.vector_store %arg4[%c6_111, %c0_112, %c0_113], %176 {strides = array<i32>} : memref<8x8x128xf32, #tpu.memory_space<vmem>>, vector<1x8x128xf32>,
    %c0_114 = arith.constant 0 : index
    %c7 = arith.constant 7 : index
    %c0_115 = arith.constant 0 : index
    %177 = vector.load %arg5[%c0_114, %c7, %c0_115] : memref<8x8x128xf32, #tpu.memory_space<vmem>>, vector<8x1x128xf32>
    %178 = vector.shape_cast %177 : vector<8x1x128xf32> to vector<8x128xf32>
    %c7_116 = arith.constant 7 : index
    %c0_117 = arith.constant 0 : index
    %c0_118 = arith.constant 0 : index
    %179 = vector.load %arg4[%c7_116, %c0_117, %c0_118] : memref<8x8x128xf32, #tpu.memory_space<vmem>>, vector<1x8x128xf32>
    %180 = vector.shape_cast %179 : vector<1x8x128xf32> to vector<8x128xf32>
    %181 = vector.shape_cast %178 : vector<8x128xf32> to vector<1x8x128xf32>
    tpu.vector_store %arg4[%c7_116, %c0_117, %c0_118], %181 {strides = array<i32>} : memref<8x8x128xf32, #tpu.memory_space<vmem>>, vector<1x8x128xf32>,
    return
  }
  func.func @transform_0(%arg0: i32, %arg1: i32) -> (i32, i32, i32) {
    %c0_i32 = arith.constant 0 : i32
    %c0_i32_0 = arith.constant 0 : i32
    return %arg1, %arg0, %c0_i32 : i32, i32, i32
  }
  func.func @transform_1(%arg0: i32, %arg1: i32) -> (i32, i32) {
    %c0_i32 = arith.constant 0 : i32
    %c0_i32_0 = arith.constant 0 : i32
    %c0_i32_1 = arith.constant 0 : i32
    return %c0_i32, %c0_i32_0 : i32, i32
  }
  func.func @transform_2(%arg0: i32, %arg1: i32) -> (i32, i32, i32) {
    %c0_i32 = arith.constant 0 : i32
    %c0_i32_0 = arith.constant 0 : i32
    return %arg0, %arg1, %c0_i32 : i32, i32, i32
  }
}

</mosaic_0001>

<llo_original>
// kernel: tpu_custom_call.1
$region0: #{tpu_custom_call.1}
  #allocation0 [shape = 'u32[]', space=smem, size = 0x4, offset = 0x4, fixed_abs, tag = 'smem constant byte address 0x4 - core index']
  #allocation1 [shape = 'u32[144,128]{1,0:T(1,128)}', space=vmem, size = 0x12000, scoped, tag = 'internal scratch']
  #allocation2 [shape = 'f32[8,8,128]{2,1,0:T(8,128)}', space=vmem, size = 0x8000, scoped, tag = 'scratch operand']
  #allocation3 [shape = 'f32[8,128]{1,0:T(8,128)}', space=vmem, size = 0x1000, scoped, tag = 'scratch operand']
  %s0 = inlined_call_operand.vmem [shape: f32[16,8,4], index: 0, kind: input, shape index: {}]
  %s1 = inlined_call_operand.vmem [shape: f32[4,128], index: 1, kind: input, shape index: {}]
  %s2 = inlined_call_operand.hbm [shape: f32[8,16,128], index: 2, kind: output, shape index: {}]
  %s3 = sld [smem:[#allocation0]]
  $region49: #{tpu_custom_call.1} parent=0
    _
  %s5 = ssub.s32 1, %s3
  %s6 = scalar_select 0, %s5, %s3
  $region1: #{tpu_custom_call.1} parent=0
    #allocation4 [shape = 'u8[65536]{0}', space=vmem, size = 0x10000, scoped, tag = 'output window, operand 0']
    #allocation5 [shape = 's32[2]{0}', space=sflag, size = 0x8, scoped, tag = 'scoped memory for tpu_custom_call.1']
    %7 = vsyncpa [#allocation5], 0
    %s8 = scalar_lea.sflag [#allocation5], 1
    %9 = vsyncpa %s8, 0
    loop: start=0, step=1, limit=4
    $region2: #{tpu_custom_call.1} parent=1 // loop_pre_header
      _
    $region3: #{tpu_custom_call.1} parent=1 // loop_header
      %s11 = sphi 0, %s15
      %p12 = scmp.ge.s32.totalorder %s11, 4
      %s18 = sphi 0, %s30
      %s19 = sphi 0, %s26
      %s20 = sphi 0, %s18
      %s21 = sphi 0, %s19
      %s22 = sphi 0, %s20
      %s23 = sphi 0, %s21
      %s35 = sphi 0, %s37
      %s38 = sphi 0, %s35
      %s39 = sphi 0, %s38
      %s55 = sphi 0, %s39
      %s59 = sphi 0, %s59
      %s61 = sphi 0, %s59
      %s62 = sphi 0, %s61
      %s76 = sphi 0, %s62
      %s84 = sphi 0, %s86
      %s87 = sphi 0, %s84
      %s88 = sphi 0, %s87
      %s104 = sphi 0, %s88
    $region4: #{tpu_custom_call.1} parent=1 // loop_header_branch
      %14 = sbr.rel (%p12) target = $region8
    $region5: #{tpu_custom_call.1} parent=1 // loop_body
      %s16 = ssub.s32 %s11, 1
      %s17 = ssub.s32 %s11, 2
      %s24 = sadd.s32 1, %s19
      %p25 = scmp.ge.s32.totalorder %s24, 2
      %s26 = scalar_select %p25, 0, %s24
      %s27 = sadd.s32 1, %s18
      %s28 = scalar_select %p25, %s27, %s18
      %p29 = scmp.ge.s32.totalorder %s28, 1
      %s30 = scalar_select %p29, 0, %s28
      %s31 = ssub.s32 %s19, %s26
      %s32 = ssub.s32 %s18, %s30
      %s33 = sor.u32 %s31, %s32
      %p34 = scmp.eq.s32.totalorder %s33, 0
      %s36 = sadd.s32 %s35, 1
      %s37 = scalar_select %p34, %s35, %s36
      %p40 = pneg %p34
      %p41 = scmp.eq.s32.totalorder %s11, 1
      %p42 = por %p40, %p41
      %p43 = scmp.ne.s32.totalorder %s35, %s38
      %p44 = scmp.eq.s32.totalorder %s11, 0
      %p45 = por %p43, %p44
      %p46 = scmp.ne.s32.totalorder %s35, %s38
      %p47 = scmp.eq.s32.totalorder %s16, 1
      %p48 = por %p46, %p47
      %p49 = scmp.ne.s32.totalorder %s38, %s39
      %p50 = scmp.eq.s32.totalorder %s16, 0
      %p51 = por %p49, %p50
      %p52 = scmp.ne.s32.totalorder %s38, %s39
      %p53 = scmp.eq.s32.totalorder %s17, 1
      %p54 = por %p52, %p53
      %p56 = scmp.ne.s32.totalorder %s39, %s55
      %p57 = scmp.eq.s32.totalorder %s17, 0
      %p58 = por %p56, %p57
      %s60 = sadd.s32 %s59, 1
      %p63 = scmp.eq.s32.totalorder %s11, 1
      %p64 = scmp.ne.s32.totalorder %s59, %s61
      %p65 = scmp.eq.s32.totalorder %s11, 0
      %p66 = por %p64, %p65
      %p67 = scmp.ne.s32.totalorder %s59, %s61
      %p68 = scmp.eq.s32.totalorder %s16, 1
      %p69 = por %p67, %p68
      %p70 = scmp.ne.s32.totalorder %s61, %s62
      %p71 = scmp.eq.s32.totalorder %s16, 0
      %p72 = por %p70, %p71
      %p73 = scmp.ne.s32.totalorder %s61, %s62
      %p74 = scmp.eq.s32.totalorder %s17, 1
      %p75 = por %p73, %p74
      %p77 = scmp.ne.s32.totalorder %s62, %s76
      %p78 = scmp.eq.s32.totalorder %s17, 0
      %p79 = por %p77, %p78
      %s80 = ssub.s32 %s18, %s30
      %s81 = ssub.s32 %s19, %s26
      %s82 = sor.u32 %s80, %s81
      %p83 = scmp.eq.s32.totalorder %s82, 0
      %s85 = sadd.s32 %s84, 1
      %s86 = scalar_select %p83, %s84, %s85
      %p89 = pneg %p83
      %p90 = scmp.eq.s32.totalorder %s11, 1
      %p91 = por %p89, %p90
      %p92 = scmp.ne.s32.totalorder %s84, %s87
      %p93 = scmp.eq.s32.totalorder %s11, 0
      %p94 = por %p92, %p93
      %p95 = scmp.ne.s32.totalorder %s84, %s87
      %p96 = scmp.eq.s32.totalorder %s16, 1
      %p97 = por %p95, %p96
      %p98 = scmp.ne.s32.totalorder %s87, %s88
      %p99 = scmp.eq.s32.totalorder %s16, 0
      %p100 = por %p98, %p99
      %p101 = scmp.ne.s32.totalorder %s87, %s88
      %p102 = scmp.eq.s32.totalorder %s17, 1
      %p103 = por %p101, %p102
      %p105 = scmp.ne.s32.totalorder %s88, %s104
      %p106 = scmp.eq.s32.totalorder %s17, 0
      %p107 = por %p105, %p106
      %p108 = scmp.le.s32.totalorder 1, %s11
      %p109 = scmp.lt.s32.totalorder %s11, 3
      %p110 = pnand %p108, %p109
      %p111 = pneg %p110
      // Predicated region
      $region9: #{tpu_custom_call.1} parent=5 // pred_check
        _
      $region10: #{tpu_custom_call.1} parent=5 // pred_check_branch
        %113 = sbr.rel (%p110) target = $region12
      $region11: #{tpu_custom_call.1} parent=5 // pred_region
        %s114 = ssub.s32 %s11, 1
        // Predicated region
        $region13: #{tpu_custom_call.1} parent=11 // pred_check
          %p115 = pneg %p72
        $region14: #{tpu_custom_call.1} parent=11 // pred_check_branch
          %117 = sbr.rel (%p115) target = $region16
        $region15: #{tpu_custom_call.1} parent=11 // pred_region
          _
        $region16: #{tpu_custom_call.1} parent=11 // pred_fallthru
          _
      $region12: #{tpu_custom_call.1} parent=5 // pred_fallthru
        _
      %p118 = scmp.lt.s32.totalorder %s11, 2
      // Predicated region
      $region17: #{tpu_custom_call.1} parent=5 // pred_check
        %p119 = pneg %p118
      $region18: #{tpu_custom_call.1} parent=5 // pred_check_branch
        %121 = sbr.rel (%p119) target = $region20
      $region19: #{tpu_custom_call.1} parent=5 // pred_region
        // Predicated region
        $region21: #{tpu_custom_call.1} parent=19 // pred_check
          %p122 = pneg %p45
        $region22: #{tpu_custom_call.1} parent=19 // pred_check_branch
          %124 = sbr.rel (%p122) target = $region24
        $region23: #{tpu_custom_call.1} parent=19 // pred_region
          %s125 = smul.u32 8, %s19
          %p126 = scmp.lt.s32.totalorder %s125, 15
          %s127 = scalar_select %p126, %s125, 15
          %p128 = scmp.lt.s32.totalorder %s18, 0
          %s129 = scalar_select %p128, %s18, 0
          %s130 = sadd.s32 %s129, %s127
          %s131 = smul.addr %s130, 8
          %s132 = scalar_lea.vmem %s0, %s131
          %s133 = smul.u32 8, %s19
        $region24: #{tpu_custom_call.1} parent=19 // pred_fallthru
          _
      $region20: #{tpu_custom_call.1} parent=5 // pred_fallthru
        _
      %p134 = scmp.le.s32.totalorder 1, %s11
      %p135 = scmp.lt.s32.totalorder %s11, 3
      %p136 = pnand %p134, %p135
      %p137 = pneg %p136
      // Predicated region
      $region25: #{tpu_custom_call.1} parent=5 // pred_check
        _
      $region26: #{tpu_custom_call.1} parent=5 // pred_check_branch
        %139 = sbr.rel (%p136) target = $region28
      $region27: #{tpu_custom_call.1} parent=5 // pred_region
        %s140 = ssub.s32 %s11, 1
        %s141 = smul.u32 8, %s21
        %p142 = scmp.lt.s32.totalorder %s141, 15
        %s143 = scalar_select %p142, %s141, 15
        %p144 = scmp.lt.s32.totalorder %s20, 0
        %s145 = scalar_select %p144, %s20, 0
        %s146 = sadd.s32 %s145, %s143
        %s147 = smul.addr %s146, 8
        %s148 = scalar_lea.vmem %s0, %s147
        %p149 = pneg %p51
        %p150 = pneg %p48
        %p151 = pneg %p72
        %p152 = pneg %p69
        %p153 = pneg %p100
        %p154 = pneg %p97
        %s155 = sand.u32 %s87, 1
        %s156 = scalar_lea.sflag [#allocation5], %s155
        %s157 = sand.u32 %s87, 1
        %s158 = smul.addr %s157, 64
        %s159 = scalar_lea.vmem [#allocation4], %s158
        %s160 = smul.u32 8, %s21
        %p161 = scmp.lt.s32.totalorder %s160, 15
        %s162 = scalar_select %p161, %s160, 15
        %p163 = scmp.lt.s32.totalorder %s20, 0
        %s164 = scalar_select %p163, %s20, 0
        %s165 = sadd.s32 %s164, %s162
        %s166 = smul.addr %s165, 8
        %s167 = scalar_lea.vmem %s0, %s166
        %s168 = smul.u32 8, %s21
        %s169 = smul.u32 8, %s20
        %p170 = scmp.eq.s32.totalorder %s21, 0
        // Predicated region
        $region29: #{tpu_custom_call.1} parent=27 // pred_check
          %p171 = pneg %p170
        $region30: #{tpu_custom_call.1} parent=27 // pred_check_branch
          %173 = sbr.rel (%p171) target = $region32
        $region31: #{tpu_custom_call.1} parent=27 // pred_region
          %174 = vst [vmem:[#allocation3] sm:$0xff] 0.0
        $region32: #{tpu_custom_call.1} parent=27 // pred_fallthru
          _
        %v175 = vld [vmem:[%s167] sm:$0xff]
        %v176 = vld [vmem:[%s167 + $0x8] sm:$0xff]
        %v177 = vld [vmem:[%s167 + $0x10] sm:$0xff]
        %v178 = vld [vmem:[%s167 + $0x18] sm:$0xff]
        %v179 = vld [vmem:[%s167 + $0x20] sm:$0xff]
        %v180 = vld [vmem:[%s167 + $0x28] sm:$0xff]
        %v181 = vld [vmem:[%s167 + $0x30] sm:$0xff]
        %v182 = vld [vmem:[%s167 + $0x38] sm:$0xff]
        %v183 = vld [vmem:[%s1] sm:$0xf]
        %vm184 = vcmask 31744
        %v186 = vsel %vm184, %v175, 0
        %v189 = vsel %vm184, %v176, 0
        %v192 = vsel %vm184, %v177, 0
        %v195 = vsel %vm184, %v178, 0
        %v198 = vsel %vm184, %v179, 0
        %v201 = vsel %vm184, %v180, 0
        %v204 = vsel %vm184, %v181, 0
        %v207 = vsel %vm184, %v182, 0
        %vm209 = vcmask 1043456
        %v211 = vsel %vm209, %v183, 0
        %213 = vmatprep.subr.mxu0 0.0
        %214 = vmatpush1.msra.mxu0 0.0
        %215 = vmatprep.subr.mxu0 0.0
        %216 = vmatpush1.msra.mxu0 0.0
        %217 = vmatprep.subr.mxu0 0.0
        %218 = vmatpush1.msra.mxu0 0.0
        %219 = vmatprep.subr.mxu0 0.0
        %220 = vmatpush1.msra.mxu0 0.0
        %221 = vmatprep.subr.mxu0 0.0
        %222 = vmatpush1.msra.mxu0 0.0
        %223 = vmatprep.subr.mxu0 0.0
        %224 = vmatpush1.msra.mxu0 0.0
        %225 = vmatprep.subr.mxu0 0.0
        %226 = vmatpush1.msra.mxu0 0.0
        %227 = vmatprep.subr.mxu0 0.0
        %228 = vmatpush1.msra.mxu0 0.0
        %229 = vmatprep.subr.mxu0 0.0
        %230 = vmatpush1.msra.mxu0 0.0
        %231 = vmatprep.subr.mxu0 0.0
        %232 = vmatpush1.msra.mxu0 0.0
        %233 = vmatprep.subr.mxu0 0.0
        %234 = vmatpush1.msra.mxu0 0.0
        %235 = vmatprep.subr.mxu0 0.0
        %236 = vmatpush1.msra.mxu0 0.0
        %237 = vmatprep.subr.mxu0 0.0
        %238 = vmatpush1.msra.mxu0 0.0
        %239 = vmatprep.subr.mxu0 0.0
        %240 = vmatpush1.msra.mxu0 0.0
        %241 = vmatprep.subr.mxu0 0.0
        %242 = vmatpush1.msra.mxu0 0.0
        %243 = vmatprep.subr.mxu0 0.0
        %244 = vmatpush1.msra.mxu0 %v211
        %245 = vmatprep.subr.mxu0 0.0
        %246 = vmatpush2.msra.mxu0 0.0
        %247 = vmatprep.subr.mxu0 0.0
        %248 = vmatpush2.msra.mxu0 0.0
        %249 = vmatprep.subr.mxu0 0.0
        %250 = vmatpush2.msra.mxu0 0.0
        %251 = vmatprep.subr.mxu0 0.0
        %252 = vmatpush2.msra.mxu0 0.0
        %253 = vmatprep.subr.mxu0 0.0
        %254 = vmatpush2.msra.mxu0 0.0
        %255 = vmatprep.subr.mxu0 0.0
        %256 = vmatpush2.msra.mxu0 0.0
        %257 = vmatprep.subr.mxu0 0.0
        %258 = vmatpush2.msra.mxu0 0.0
        %259 = vmatprep.subr.mxu0 0.0
        %260 = vmatpush2.msra.mxu0 0.0
        %261 = vmatprep.subr.mxu0 0.0
        %262 = vmatpush2.msra.mxu0 0.0
        %263 = vmatprep.subr.mxu0 0.0
        %264 = vmatpush2.msra.mxu0 0.0
        %265 = vmatprep.subr.mxu0 0.0
        %266 = vmatpush2.msra.mxu0 0.0
        %267 = vmatprep.subr.mxu0 0.0
        %268 = vmatpush2.msra.mxu0 0.0
        %269 = vmatprep.subr.mxu0 0.0
        %270 = vmatpush2.msra.mxu0 0.0
        %271 = vmatprep.subr.mxu0 0.0
        %272 = vmatpush2.msra.mxu0 0.0
        %273 = vmatprep.subr.mxu0 0.0
        %274 = vmatpush2.msra.mxu0 0.0
        %275 = vmatprep.subr.mxu0 0.0
        %276 = vmatpush2.msra.mxu0 0.0
        %277 = vmatprep.mubr.f32.mxu0 0.0
        %278 = vmatmul.mubr.f32.gmra.mxu0 %v186
        %v279 = vpop.f32.mrf.mxu0
        %v280 = vadd.f32 0.0, %v279
        %v281 = vpop.f32.mrf.mxu0
        %282 = vmatprep.mubr.f32.mxu0 0.0
        %283 = vmatmul.mubr.f32.gmra.mxu0 %v189
        %v284 = vpop.f32.mrf.mxu0
        %v285 = vadd.f32 0.0, %v284
        %v286 = vpop.f32.mrf.mxu0
        %287 = vmatprep.mubr.f32.mxu0 0.0
        %288 = vmatmul.mubr.f32.gmra.mxu0 %v192
        %v289 = vpop.f32.mrf.mxu0
        %v290 = vadd.f32 0.0, %v289
        %v291 = vpop.f32.mrf.mxu0
        %292 = vmatprep.mubr.f32.mxu0 0.0
        %293 = vmatmul.mubr.f32.gmra.mxu0 %v195
        %v294 = vpop.f32.mrf.mxu0
        %v295 = vadd.f32 0.0, %v294
        %v296 = vpop.f32.mrf.mxu0
        %297 = vmatprep.mubr.f32.mxu0 0.0
        %298 = vmatmul.mubr.f32.gmra.mxu0 %v198
        %v299 = vpop.f32.mrf.mxu0
        %v300 = vadd.f32 0.0, %v299
        %v301 = vpop.f32.mrf.mxu0
        %302 = vmatprep.mubr.f32.mxu0 0.0
        %303 = vmatmul.mubr.f32.gmra.mxu0 %v201
        %v304 = vpop.f32.mrf.mxu0
        %v305 = vadd.f32 0.0, %v304
        %v306 = vpop.f32.mrf.mxu0
        %307 = vmatprep.mubr.f32.mxu0 0.0
        %308 = vmatmul.mubr.f32.gmra.mxu0 %v204
        %v309 = vpop.f32.mrf.mxu0
        %v310 = vadd.f32 0.0, %v309
        %v311 = vpop.f32.mrf.mxu0
        %312 = vmatprep.mubr.f32.mxu0 0.0
        %313 = vmatmul.mubr.f32.gmra.mxu0 %v207
        %v314 = vpop.f32.mrf.mxu0
        %v315 = vadd.f32 0.0, %v314
        %v316 = vpop.f32.mrf.mxu0
        %317 = vdwg.mxu0
        %318 = vst [vmem:[#allocation2] sm:$0xff] %v280
        %319 = vst [vmem:[#allocation2 + $0x8] sm:$0xff] %v285
        %320 = vst [vmem:[#allocation2 + $0x10] sm:$0xff] %v290
        %321 = vst [vmem:[#allocation2 + $0x18] sm:$0xff] %v295
        %322 = vst [vmem:[#allocation2 + $0x20] sm:$0xff] %v300
        %323 = vst [vmem:[#allocation2 + $0x28] sm:$0xff] %v305
        %324 = vst [vmem:[#allocation2 + $0x30] sm:$0xff] %v310
        %325 = vst [vmem:[#allocation2 + $0x38] sm:$0xff] %v315
        %v326 = vld [vmem:[#allocation3] sm:$0xff]
        %327 = vrot.lane.b32.xlu0 %v326, 127
        %v328 = vpop.permute.xlu0 %327
        %v329 = vmul.f32 %v328, 0.15
        %330 = vrot.lane.b32.xlu0 %v326, 1
        %v331 = vpop.permute.xlu0 %330
        %v332 = vmul.f32 %v331, 0.85
        %v333 = vadd.f32 %v329, %v332
        %v334 = vld [vmem:[#allocation2] sm:$0xff]
        %v335 = vadd.f32 %v333, %v334
        %v336 = vtanh.pop %v335
        %337 = vst [vmem:[#allocation2] sm:$0xff] %v336
        %338 = vrot.lane.b32.xlu0 %v336, 127
        %v339 = vpop.permute.xlu0 %338
        %v340 = vmul.f32 %v339, 0.15
        %341 = vrot.lane.b32.xlu0 %v336, 1
        %v342 = vpop.permute.xlu0 %341
        %v343 = vmul.f32 %v342, 0.85
        %v344 = vadd.f32 %v340, %v343
        %s345 = scalar_lea.vmem [#allocation2], 8
        %v346 = vld [vmem:[%s345] sm:$0xff]
        %v347 = vadd.f32 %v344, %v346
        %v348 = vtanh.pop %v347
        %349 = vst [vmem:[%s345] sm:$0xff] %v348
        %350 = vrot.lane.b32.xlu0 %v348, 127
        %v351 = vpop.permute.xlu0 %350
        %v352 = vmul.f32 %v351, 0.15
        %353 = vrot.lane.b32.xlu0 %v348, 1
        %v354 = vpop.permute.xlu0 %353
        %v355 = vmul.f32 %v354, 0.85
        %v356 = vadd.f32 %v352, %v355
        %s357 = scalar_lea.vmem [#allocation2], 16
        %v358 = vld [vmem:[%s357] sm:$0xff]
        %v359 = vadd.f32 %v356, %v358
        %v360 = vtanh.pop %v359
        %361 = vst [vmem:[%s357] sm:$0xff] %v360
        %362 = vrot.lane.b32.xlu0 %v360, 127
        %v363 = vpop.permute.xlu0 %362
        %v364 = vmul.f32 %v363, 0.15
        %365 = vrot.lane.b32.xlu0 %v360, 1
        %v366 = vpop.permute.xlu0 %365
        %v367 = vmul.f32 %v366, 0.85
        %v368 = vadd.f32 %v364, %v367
        %s369 = scalar_lea.vmem [#allocation2], 24
        %v370 = vld [vmem:[%s369] sm:$0xff]
        %v371 = vadd.f32 %v368, %v370
        %v372 = vtanh.pop %v371
        %373 = vst [vmem:[%s369] sm:$0xff] %v372
        %374 = vrot.lane.b32.xlu0 %v372, 127
        %v375 = vpop.permute.xlu0 %374
        %v376 = vmul.f32 %v375, 0.15
        %377 = vrot.lane.b32.xlu0 %v372, 1
        %v378 = vpop.permute.xlu0 %377
        %v379 = vmul.f32 %v378, 0.85
        %v380 = vadd.f32 %v376, %v379
        %s381 = scalar_lea.vmem [#allocation2], 32
        %v382 = vld [vmem:[%s381] sm:$0xff]
        %v383 = vadd.f32 %v380, %v382
        %v384 = vtanh.pop %v383
        %385 = vst [vmem:[%s381] sm:$0xff] %v384
        %386 = vrot.lane.b32.xlu0 %v384, 127
        %v387 = vpop.permute.xlu0 %386
        %v388 = vmul.f32 %v387, 0.15
        %389 = vrot.lane.b32.xlu0 %v384, 1
        %v390 = vpop.permute.xlu0 %389
        %v391 = vmul.f32 %v390, 0.85
        %v392 = vadd.f32 %v388, %v391
        %s393 = scalar_lea.vmem [#allocation2], 40
        %v394 = vld [vmem:[%s393] sm:$0xff]
        %v395 = vadd.f32 %v392, %v394
        %v396 = vtanh.pop %v395
        %397 = vst [vmem:[%s393] sm:$0xff] %v396
        %398 = vrot.lane.b32.xlu0 %v396, 127
        %v399 = vpop.permute.xlu0 %398
        %v400 = vmul.f32 %v399, 0.15
        %401 = vrot.lane.b32.xlu0 %v396, 1
        %v402 = vpop.permute.xlu0 %401
        %v403 = vmul.f32 %v402, 0.85
        %v404 = vadd.f32 %v400, %v403
        %s405 = scalar_lea.vmem [#allocation2], 48
        %v406 = vld [vmem:[%s405] sm:$0xff]
        %v407 = vadd.f32 %v404, %v406
        %v408 = vtanh.pop %v407
        %409 = vst [vmem:[%s405] sm:$0xff] %v408
        %410 = vrot.lane.b32.xlu0 %v408, 127
        %v411 = vpop.permute.xlu0 %410
        %v412 = vmul.f32 %v411, 0.15
        %413 = vrot.lane.b32.xlu0 %v408, 1
        %v414 = vpop.permute.xlu0 %413
        %v415 = vmul.f32 %v414, 0.85
        %v416 = vadd.f32 %v412, %v415
        %s417 = scalar_lea.vmem [#allocation2], 56
        %v418 = vld [vmem:[%s417] sm:$0xff]
        %v419 = vadd.f32 %v416, %v418
        %v420 = vtanh.pop %v419
        %421 = vst [vmem:[%s417] sm:$0xff] %v420
        %422 = vst [vmem:[#allocation3] sm:$0xff] %v420
        %p423 = scmp.eq.s32.totalorder %s21, 1
        // Predicated region
        $region33: #{tpu_custom_call.1} parent=27 // pred_check
          %p424 = pneg %p423
        $region34: #{tpu_custom_call.1} parent=27 // pred_check_branch
          %426 = sbr.rel (%p424) target = $region36
        $region35: #{tpu_custom_call.1} parent=27 // pred_region
          %427 = vst [vmem:[%s417] sm:$0xff] 0.0
        $region36: #{tpu_custom_call.1} parent=27 // pred_fallthru
          _
        %v428 = vld [vmem:[#allocation2] sm:$0x1]
        %v429 = vld [vmem:[#allocation2 + $0x8] sm:$0x1]
        %v430 = vld [vmem:[#allocation2 + $0x10] sm:$0x1]
        %v431 = vld [vmem:[#allocation2 + $0x18] sm:$0x1]
        %v432 = vld [vmem:[#allocation2 + $0x20] sm:$0x1]
        %v433 = vld [vmem:[#allocation2 + $0x28] sm:$0x1]
        %v434 = vld [vmem:[#allocation2 + $0x30] sm:$0x1]
        %v435 = vld [vmem:[#allocation2 + $0x38] sm:$0x1]
        %v444 = vrot.slane %v429, 7
        %vm445 = vcmask 1041409
        %v446 = vsel %vm445, %v444, %v428
        %v447 = vrot.slane %v430, 6
        %vm448 = vcmask 1042434
        %v449 = vsel %vm448, %v447, %v446
        %v450 = vrot.slane %v431, 5
        %vm451 = vcmask 1043459
        %v452 = vsel %vm451, %v450, %v449
        %v453 = vrot.slane %v432, 4
        %vm454 = vcmask 1044484
        %v455 = vsel %vm454, %v453, %v452
        %v456 = vrot.slane %v433, 3
        %vm457 = vcmask 1045509
        %v458 = vsel %vm457, %v456, %v455
        %v459 = vrot.slane %v434, 2
        %vm460 = vcmask 1046534
        %v461 = vsel %vm460, %v459, %v458
        %v462 = vrot.slane %v435, 1
        %vm463 = vcmask 1047559
        %v464 = vsel %vm463, %v462, %v461
        %466 = vst [vmem:[%s159] sm:$0xff] %v464
        %v467 = vld [vmem:[#allocation2 + $0x1] sm:$0x1]
        %v468 = vld [vmem:[#allocation2 + $0x9] sm:$0x1]
        %v469 = vld [vmem:[#allocation2 + $0x11] sm:$0x1]
        %v470 = vld [vmem:[#allocation2 + $0x19] sm:$0x1]
        %v471 = vld [vmem:[#allocation2 + $0x21] sm:$0x1]
        %v472 = vld [vmem:[#allocation2 + $0x29] sm:$0x1]
        %v473 = vld [vmem:[#allocation2 + $0x31] sm:$0x1]
        %v474 = vld [vmem:[#allocation2 + $0x39] sm:$0x1]
        %v483 = vrot.slane %v468, 7
        %v484 = vsel %vm445, %v483, %v467
        %v485 = vrot.slane %v469, 6
        %v486 = vsel %vm448, %v485, %v484
        %v487 = vrot.slane %v470, 5
        %v488 = vsel %vm451, %v487, %v486
        %v489 = vrot.slane %v471, 4
        %v490 = vsel %vm454, %v489, %v488
        %v491 = vrot.slane %v472, 3
        %v492 = vsel %vm457, %v491, %v490
        %v493 = vrot.slane %v473, 2
        %v494 = vsel %vm460, %v493, %v492
        %v495 = vrot.slane %v474, 1
        %v496 = vsel %vm463, %v495, %v494
        %s498 = scalar_lea.vmem %s159, 8 [#allocation4]
        %499 = vst [vmem:[%s498] sm:$0xff] %v496
        %v500 = vld [vmem:[#allocation2 + $0x2] sm:$0x1]
        %v501 = vld [vmem:[#allocation2 + $0xa] sm:$0x1]
        %v502 = vld [vmem:[#allocation2 + $0x12] sm:$0x1]
        %v503 = vld [vmem:[#allocation2 + $0x1a] sm:$0x1]
        %v504 = vld [vmem:[#allocation2 + $0x22] sm:$0x1]
        %v505 = vld [vmem:[#allocation2 + $0x2a] sm:$0x1]
        %v506 = vld [vmem:[#allocation2 + $0x32] sm:$0x1]
        %v507 = vld [vmem:[#allocation2 + $0x3a] sm:$0x1]
        %v516 = vrot.slane %v501, 7
        %v517 = vsel %vm445, %v516, %v500
        %v518 = vrot.slane %v502, 6
        %v519 = vsel %vm448, %v518, %v517
        %v520 = vrot.slane %v503, 5
        %v521 = vsel %vm451, %v520, %v519
        %v522 = vrot.slane %v504, 4
        %v523 = vsel %vm454, %v522, %v521
        %v524 = vrot.slane %v505, 3
        %v525 = vsel %vm457, %v524, %v523
        %v526 = vrot.slane %v506, 2
        %v527 = vsel %vm460, %v526, %v525
        %v528 = vrot.slane %v507, 1
        %v529 = vsel %vm463, %v528, %v527
        %s531 = scalar_lea.vmem %s159, 16 [#allocation4]
        %532 = vst [vmem:[%s531] sm:$0xff] %v529
        %v533 = vld [vmem:[#allocation2 + $0x3] sm:$0x1]
        %v534 = vld [vmem:[#allocation2 + $0xb] sm:$0x1]
        %v535 = vld [vmem:[#allocation2 + $0x13] sm:$0x1]
        %v536 = vld [vmem:[#allocation2 + $0x1b] sm:$0x1]
        %v537 = vld [vmem:[#allocation2 + $0x23] sm:$0x1]
        %v538 = vld [vmem:[#allocation2 + $0x2b] sm:$0x1]
        %v539 = vld [vmem:[#allocation2 + $0x33] sm:$0x1]
        %v540 = vld [vmem:[#allocation2 + $0x3b] sm:$0x1]
        %v549 = vrot.slane %v534, 7
        %v550 = vsel %vm445, %v549, %v533
        %v551 = vrot.slane %v535, 6
        %v552 = vsel %vm448, %v551, %v550
        %v553 = vrot.slane %v536, 5
        %v554 = vsel %vm451, %v553, %v552
        %v555 = vrot.slane %v537, 4
        %v556 = vsel %vm454, %v555, %v554
        %v557 = vrot.slane %v538, 3
        %v558 = vsel %vm457, %v557, %v556
        %v559 = vrot.slane %v539, 2
        %v560 = vsel %vm460, %v559, %v558
        %v561 = vrot.slane %v540, 1
        %v562 = vsel %vm463, %v561, %v560
        %s564 = scalar_lea.vmem %s159, 24 [#allocation4]
        %565 = vst [vmem:[%s564] sm:$0xff] %v562
        %v566 = vld [vmem:[#allocation2 + $0x4] sm:$0x1]
        %v567 = vld [vmem:[#allocation2 + $0xc] sm:$0x1]
        %v568 = vld [vmem:[#allocation2 + $0x14] sm:$0x1]
        %v569 = vld [vmem:[#allocation2 + $0x1c] sm:$0x1]
        %v570 = vld [vmem:[#allocation2 + $0x24] sm:$0x1]
        %v571 = vld [vmem:[#allocation2 + $0x2c] sm:$0x1]
        %v572 = vld [vmem:[#allocation2 + $0x34] sm:$0x1]
        %v573 = vld [vmem:[#allocation2 + $0x3c] sm:$0x1]
        %v582 = vrot.slane %v567, 7
        %v583 = vsel %vm445, %v582, %v566
        %v584 = vrot.slane %v568, 6
        %v585 = vsel %vm448, %v584, %v583
        %v586 = vrot.slane %v569, 5
        %v587 = vsel %vm451, %v586, %v585
        %v588 = vrot.slane %v570, 4
        %v589 = vsel %vm454, %v588, %v587
        %v590 = vrot.slane %v571, 3
        %v591 = vsel %vm457, %v590, %v589
        %v592 = vrot.slane %v572, 2
        %v593 = vsel %vm460, %v592, %v591
        %v594 = vrot.slane %v573, 1
        %v595 = vsel %vm463, %v594, %v593
        %s597 = scalar_lea.vmem %s159, 32 [#allocation4]
        %598 = vst [vmem:[%s597] sm:$0xff] %v595
        %v599 = vld [vmem:[#allocation2 + $0x5] sm:$0x1]
        %v600 = vld [vmem:[#allocation2 + $0xd] sm:$0x1]
        %v601 = vld [vmem:[#allocation2 + $0x15] sm:$0x1]
        %v602 = vld [vmem:[#allocation2 + $0x1d] sm:$0x1]
        %v603 = vld [vmem:[#allocation2 + $0x25] sm:$0x1]
        %v604 = vld [vmem:[#allocation2 + $0x2d] sm:$0x1]
        %v605 = vld [vmem:[#allocation2 + $0x35] sm:$0x1]
        %v606 = vld [vmem:[#allocation2 + $0x3d] sm:$0x1]
        %v615 = vrot.slane %v600, 7
        %v616 = vsel %vm445, %v615, %v599
        %v617 = vrot.slane %v601, 6
        %v618 = vsel %vm448, %v617, %v616
        %v619 = vrot.slane %v602, 5
        %v620 = vsel %vm451, %v619, %v618
        %v621 = vrot.slane %v603, 4
        %v622 = vsel %vm454, %v621, %v620
        %v623 = vrot.slane %v604, 3
        %v624 = vsel %vm457, %v623, %v622
        %v625 = vrot.slane %v605, 2
        %v626 = vsel %vm460, %v625, %v624
        %v627 = vrot.slane %v606, 1
        %v628 = vsel %vm463, %v627, %v626
        %s630 = scalar_lea.vmem %s159, 40 [#allocation4]
        %631 = vst [vmem:[%s630] sm:$0xff] %v628
        %v632 = vld [vmem:[#allocation2 + $0x6] sm:$0x1]
        %v633 = vld [vmem:[#allocation2 + $0xe] sm:$0x1]
        %v634 = vld [vmem:[#allocation2 + $0x16] sm:$0x1]
        %v635 = vld [vmem:[#allocation2 + $0x1e] sm:$0x1]
        %v636 = vld [vmem:[#allocation2 + $0x26] sm:$0x1]
        %v637 = vld [vmem:[#allocation2 + $0x2e] sm:$0x1]
        %v638 = vld [vmem:[#allocation2 + $0x36] sm:$0x1]
        %v639 = vld [vmem:[#allocation2 + $0x3e] sm:$0x1]
        %v648 = vrot.slane %v633, 7
        %v649 = vsel %vm445, %v648, %v632
        %v650 = vrot.slane %v634, 6
        %v651 = vsel %vm448, %v650, %v649
        %v652 = vrot.slane %v635, 5
        %v653 = vsel %vm451, %v652, %v651
        %v654 = vrot.slane %v636, 4
        %v655 = vsel %vm454, %v654, %v653
        %v656 = vrot.slane %v637, 3
        %v657 = vsel %vm457, %v656, %v655
        %v658 = vrot.slane %v638, 2
        %v659 = vsel %vm460, %v658, %v657
        %v660 = vrot.slane %v639, 1
        %v661 = vsel %vm463, %v660, %v659
        %s663 = scalar_lea.vmem %s159, 48 [#allocation4]
        %664 = vst [vmem:[%s663] sm:$0xff] %v661
        %v665 = vld [vmem:[#allocation2 + $0x7] sm:$0x1]
        %v666 = vld [vmem:[#allocation2 + $0xf] sm:$0x1]
        %v667 = vld [vmem:[#allocation2 + $0x17] sm:$0x1]
        %v668 = vld [vmem:[#allocation2 + $0x1f] sm:$0x1]
        %v669 = vld [vmem:[#allocation2 + $0x27] sm:$0x1]
        %v670 = vld [vmem:[#allocation2 + $0x2f] sm:$0x1]
        %v671 = vld [vmem:[#allocation2 + $0x37] sm:$0x1]
        %v672 = vld [vmem:[#allocation2 + $0x3f] sm:$0x1]
        %v681 = vrot.slane %v666, 7
        %v682 = vsel %vm445, %v681, %v665
        %v683 = vrot.slane %v667, 6
        %v684 = vsel %vm448, %v683, %v682
        %v685 = vrot.slane %v668, 5
        %v686 = vsel %vm451, %v685, %v684
        %v687 = vrot.slane %v669, 4
        %v688 = vsel %vm454, %v687, %v686
        %v689 = vrot.slane %v670, 3
        %v690 = vsel %vm457, %v689, %v688
        %v691 = vrot.slane %v671, 2
        %v692 = vsel %vm460, %v691, %v690
        %v693 = vrot.slane %v672, 1
        %v694 = vsel %vm463, %v693, %v692
        %s696 = scalar_lea.vmem %s159, 56 [#allocation4]
        %697 = vst [vmem:[%s696] sm:$0xff] %v694
        %s698 = sand.u32 %s87, 1
        %s699 = scalar_lea.sflag [#allocation5], %s698
        %s700 = sand.u32 %s87, 1
        %s701 = smul.addr %s700, 64
        %s702 = scalar_lea.vmem [#allocation4], %s701
        // Predicated region
        $region37: #{tpu_custom_call.1} parent=27 // pred_check
          %p703 = pneg %p97
        $region38: #{tpu_custom_call.1} parent=27 // pred_check_branch
          %705 = sbr.rel (%p703) target = $region40
        $region39: #{tpu_custom_call.1} parent=27 // pred_region
          %s706 = smul.u32 8, %s20
          %s708 = ssub.s32 1024, 1024
          %709 = vsyncadd %s699, %s708
          %s710 = smul.addr %s706, 2
          %s711 = sadd.s32 %s21, %s710
          %s712 = smul.addr %s711, 128
          %s713 = scalar_lea.hbm %s2, %s712
          %s714 = sshll.u32 %s702, 4
          %s715 = int_to_ptr.vmem [resolvable:$true] %s714
          %720 = dma.vmem_to_hbm [thread:$0]  %s715, 1024, %s713, %s699, 128, 256, 8
        $region40: #{tpu_custom_call.1} parent=27 // pred_fallthru
          _
      $region28: #{tpu_custom_call.1} parent=5 // pred_fallthru
        _
      %p721 = scmp.le.s32.totalorder 2, %s11
      // Predicated region
      $region41: #{tpu_custom_call.1} parent=5 // pred_check
        %p722 = pneg %p721
      $region42: #{tpu_custom_call.1} parent=5 // pred_check_branch
        %724 = sbr.rel (%p722) target = $region44
      $region43: #{tpu_custom_call.1} parent=5 // pred_region
        %s725 = ssub.s32 %s11, 2
        // Predicated region
        $region45: #{tpu_custom_call.1} parent=43 // pred_check
          %p726 = pneg %p103
        $region46: #{tpu_custom_call.1} parent=43 // pred_check_branch
          %728 = sbr.rel (%p726) target = $region48
        $region47: #{tpu_custom_call.1} parent=43 // pred_region
          %s729 = sand.u32 %s88, 1
          %s730 = scalar_lea.sflag [#allocation5], %s729
          %s731 = sand.u32 %s88, 1
          %s732 = smul.addr %s731, 64
          %s733 = scalar_lea.vmem [#allocation4], %s732
          %734 = dma.done %s730, 1024
        $region48: #{tpu_custom_call.1} parent=43 // pred_fallthru
          _
      $region44: #{tpu_custom_call.1} parent=5 // pred_fallthru
        _
    $region6: #{tpu_custom_call.1} parent=1 // loop_footer
      %s15 = sadd.s32 1, %s11
    $region7: #{tpu_custom_call.1} parent=1 // loop_footer_branch
      %10 = sbr.rel target = $region3
    $region8: #{tpu_custom_call.1} parent=1 // loop_exit
      _
    %735 = vsyncpa [#allocation5], 1
    %s736 = scalar_lea.sflag [#allocation5], 1
    %737 = vsyncpa %s736, 1

</llo_original>
